<compile_context>
chip_gen: v5e
topology: v5e:2x2
jax: 0.10.0
libtpu: 0.0.40
codegen_flags: <defaults>
</compile_context>

<pallas_src>
import jax
import jax.numpy as jnp
from jax.experimental import pallas as pl
from jax.experimental.pallas import tpu as pltpu

_LANES = 128
_SUBLANES = 8                      # f32 sublanes per vreg
_TARGET_BLOCK_BYTES = 2 * 1024 * 1024   # ~2 MiB/block: big enough to amortize
                                        # per-step overhead, small enough for
                                        # v5e's 16 MiB scoped VMEM default.


def _param_sigmoid_kernel(params_ref, x_ref, o_ref):
    # params_ref lives in SMEM: [a, b, val_for_half] as f32 scalars.
    a = params_ref[0]
    b = params_ref[1]
    vhalf = params_ref[2]
    x = x_ref[...].astype(jnp.float32)
    y = jax.nn.sigmoid(x - vhalf) * (b - a) + a
    o_ref[...] = y.astype(o_ref.dtype)


def param_sigmoid(x, a, b, val_for_half=0.0):
    """Elementwise ParamSigmoid on an arbitrary-shaped array (e.g. NCHW)."""
    orig_shape = x.shape
    dtype = x.dtype
    itemsize = jnp.dtype(dtype).itemsize

    # dtype-aware minimum row granularity (packed sublanes per vreg).
    packing = max(1, 4 // itemsize)           # 1 (f32), 2 (bf16), 4 (int8/fp8)
    min_rows = _SUBLANES * packing            # 8 / 16 / 32
    target_block_rows = _TARGET_BLOCK_BYTES // (_LANES * itemsize)  # 4096/8192/16384

    flat = x.reshape(-1)
    n = flat.shape[0]

    # Rows needed, rounded up to the packed-vreg granularity.
    rows = pl.cdiv(pl.cdiv(n, _LANES), min_rows) * min_rows
    if rows <= target_block_rows:
        # Small input: one or two blocks. Prefer grid=2 so v7x megacore can
        # shard the grid across both TensorCores.
        if rows >= 2 * min_rows:
            rows = pl.cdiv(rows, 2 * min_rows) * (2 * min_rows)
            block_rows = rows // 2
        else:
            block_rows = rows
    else:
        # Large input: fixed large block, pad rows up so it divides evenly
        # (at most one extra ~2 MiB block of padding; no shrink loop).
        block_rows = target_block_rows
        rows = pl.cdiv(rows, block_rows) * block_rows

    n_pad = rows * _LANES
    padded = n_pad != n
    if padded:
        # Only the ragged tail case pays for a pad copy; aligned inputs
        # (typical NCHW activations) go straight through with a free reshape.
        flat = jnp.pad(flat, (0, n_pad - n))
    x2d = flat.reshape(rows, _LANES)

    grid = (rows // block_rows,)
    params = jnp.asarray([a, b, val_for_half], dtype=jnp.float32)

    out2d = pl.pallas_call(
        _param_sigmoid_kernel,
        out_shape=jax.ShapeDtypeStruct((rows, _LANES), dtype),
        grid_spec=pltpu.PrefetchScalarGridSpec(
            num_scalar_prefetch=1,
            grid=grid,
            in_specs=[pl.BlockSpec((block_rows, _LANES),
                                   lambda i, params: (i, 0))],
            out_specs=pl.BlockSpec((block_rows, _LANES),
                                   lambda i, params: (i, 0)),
        ),
        compiler_params=pltpu.CompilerParams(
            dimension_semantics=("parallel",)),
        cost_estimate=pl.CostEstimate(
            flops=3 * n,
            transcendentals=n,
            bytes_accessed=2 * n * itemsize),
    )(params, x2d)

    out_flat = out2d.reshape(-1)
    if padded:
        out_flat = out_flat[:n]
    return out_flat.reshape(orig_shape)


if __name__ == "__main__":
    # Module "params" (constructor args) — deterministic, in-script.
    a, b, val_for_half = 0.25, 0.75, 0.1

    key = jax.random.PRNGKey(0)
    x = jax.random.normal(key, (2, 4, 16, 16), dtype=jnp.float32)  # NCHW

    out = param_sigmoid(x, a, b, val_for_half)
    out = jax.block_until_ready(out)

    # Reference check in plain JAX.
    ref = jax.nn.sigmoid(x - val_for_half) * (b - a) + a
    assert out.shape == x.shape and out.dtype == x.dtype
    assert jnp.max(jnp.abs(out - ref)) < 1e-6

    # Also exercise an unaligned (padded) shape and a bf16 input to cover the
    # dtype-aware / ragged-tail paths.
    x2 = jax.random.normal(jax.random.PRNGKey(1), (3, 5, 7, 11), dtype=jnp.float32)
    out2 = jax.block_until_ready(param_sigmoid(x2, a, b, val_for_half))
    ref2 = jax.nn.sigmoid(x2 - val_for_half) * (b - a) + a
    assert jnp.max(jnp.abs(out2 - ref2)) < 1e-6

    x3 = jax.random.normal(jax.random.PRNGKey(2), (2, 4, 16, 16)).astype(jnp.bfloat16)
    out3 = jax.block_until_ready(param_sigmoid(x3, a, b, val_for_half))
    ref3 = (jax.nn.sigmoid(x3.astype(jnp.float32) - val_for_half) * (b - a) + a
            ).astype(jnp.bfloat16)
    assert out3.dtype == jnp.bfloat16
    assert jnp.max(jnp.abs(out3.astype(jnp.float32) - ref3.astype(jnp.float32))) < 1e-2

    print("KERNEL_OK")
</pallas_src>

<mosaic_0001>
module attributes {stable_mosaic.version = 11 : i64} {
  func.func @_param_sigmoid_kernel(%arg0: i32, %arg1: memref<3xf32, #tpu.memory_space<smem>>, %arg2: memref<8x128xf32, #tpu.memory_space<vmem>>, %arg3: memref<8x128xf32, #tpu.memory_space<vmem>>) attributes {dimension_semantics = [#tpu.dimension_semantics<parallel>], iteration_bounds = array<i64: 2>, scalar_prefetch = 1 : i64, scratch_operands = 0 : i64, tpu.core_type = #tpu.core_type<tc>, window_params = [{transform_indices = @transform_0, window_bounds = array<i64: 8, 128>}, {transform_indices = @transform_1, window_bounds = array<i64: 8, 128>}]} {
    %c0 = arith.constant 0 : index
    %0 = memref.load %arg1[%c0] : memref<3xf32, #tpu.memory_space<smem>>
    %c1 = arith.constant 1 : index
    %1 = memref.load %arg1[%c1] : memref<3xf32, #tpu.memory_space<smem>>
    %c2 = arith.constant 2 : index
    %2 = memref.load %arg1[%c2] : memref<3xf32, #tpu.memory_space<smem>>
    %c0_0 = arith.constant 0 : index
    %c0_1 = arith.constant 0 : index
    %3 = vector.load %arg2[%c0_0, %c0_1] : memref<8x128xf32, #tpu.memory_space<vmem>>, vector<8x128xf32>
    %4 = vector.broadcast %2 : f32 to vector<8x128xf32>
    %5 = arith.subf %3, %4 : vector<8x128xf32>
    %6 = arith.negf %5 : vector<8x128xf32>
    %7 = math.exp %6 : vector<8x128xf32>
    %cst = arith.constant 1.000000e+00 : f32
    %8 = vector.broadcast %cst : f32 to vector<8x128xf32>
    %9 = arith.addf %8, %7 : vector<8x128xf32>
    %10 = arith.divf %8, %9 : vector<8x128xf32>
    %11 = arith.subf %1, %0 : f32
    %12 = vector.broadcast %11 : f32 to vector<8x128xf32>
    %13 = arith.mulf %10, %12 : vector<8x128xf32>
    %14 = vector.broadcast %0 : f32 to vector<8x128xf32>
    %15 = arith.addf %13, %14 : vector<8x128xf32>
    %c0_2 = arith.constant 0 : index
    %c0_3 = arith.constant 0 : index
    %16 = vector.load %arg3[%c0_2, %c0_3] : memref<8x128xf32, #tpu.memory_space<vmem>>, vector<8x128xf32>
    tpu.vector_store %arg3[%c0_2, %c0_3], %15 {strides = array<i32>} : memref<8x128xf32, #tpu.memory_space<vmem>>, vector<8x128xf32>,
    return
  }
  func.func @transform_0(%arg0: i32, %arg1: memref<3xf32, #tpu.memory_space<smem>>) -> (i32, i32) {
    %c0_i32 = arith.constant 0 : i32
    %c0_i32_0 = arith.constant 0 : i32
    return %arg0, %c0_i32 : i32, i32
  }
  func.func @transform_1(%arg0: i32, %arg1: memref<3xf32, #tpu.memory_space<smem>>) -> (i32, i32) {
    %c0_i32 = arith.constant 0 : i32
    %c0_i32_0 = arith.constant 0 : i32
    return %arg0, %c0_i32 : i32, i32
  }
}

</mosaic_0001>

<llo_original>
// kernel: tpu_custom_call.1
$region0: #{tpu_custom_call.1}
  #allocation0 [shape = 'u32[]', space=smem, size = 0x4, offset = 0x4, fixed_abs, tag = 'smem constant byte address 0x4 - core index']
  #allocation1 [shape = 'u32[72,128]{1,0:T(1,128)}', space=vmem, size = 0x9000, scoped, tag = 'internal scratch']
  #allocation2 [shape = 's32[1]{0}', space=sflag, size = 0x4, scoped, tag = 'scoped memory for tpu_custom_call.1']
  #allocation3 [shape = 'u8[512]{0}', space=smem, size = 0x200, scoped, tag = 'prefetched SMEM operand 0']
  %s0 = inlined_call_operand.hbm [shape: f32[3], index: 0, kind: input, shape index: {}]
  %s1 = inlined_call_operand.hbm [shape: f32[16,128], index: 1, kind: input, shape index: {}]
  %s2 = inlined_call_operand.hbm [shape: f32[16,128], index: 2, kind: output, shape index: {}]
  %s3 = sld [smem:[#allocation0]]
  $region41: #{tpu_custom_call.1} parent=0
    _
  %s5 = ssub.s32 1, %s3
  %s6 = scalar_select 0, %s5, %s3
  %s8 = sshll.u32 %s0, 4
  %s9 = int_to_ptr.hbm [resolvable:$true] %s8
  %11 = dma.hbm_to_smem %s9, 16, [#allocation3], [#allocation2]
  %13 = dma.done [#allocation2], 16
  %14 = sfence
  $region1: #{tpu_custom_call.1} parent=0
    #allocation4 [shape = 'u8[8192]{0}', space=vmem, size = 0x2000, scoped, tag = 'input window, operand 1']
    #allocation5 [shape = 's32[2]{0}', space=sflag, size = 0x8, scoped, tag = 'scoped memory for tpu_custom_call.1']
    #allocation6 [shape = 's32[2]{0}', space=sflag, size = 0x8, scoped, tag = 'scoped memory for tpu_custom_call.1']
    #allocation7 [shape = 'u8[8192]{0}', space=vmem, size = 0x2000, scoped, tag = 'output window, operand 0']
    %15 = vsyncpa [#allocation5], 0
    %s16 = scalar_lea.sflag [#allocation5], 1
    %17 = vsyncpa %s16, 0
    %18 = vsyncpa [#allocation6], 0
    %s19 = scalar_lea.sflag [#allocation6], 1
    %20 = vsyncpa %s19, 0
    loop: start=0, step=1, limit=4
    $region2: #{tpu_custom_call.1} parent=1 // loop_pre_header
      _
    $region3: #{tpu_custom_call.1} parent=1 // loop_header
      %s22 = sphi 0, %s26
      %p23 = scmp.ge.s32.totalorder %s22, 4
      %s32 = sphi 0, %s34
      %s35 = sphi 0, %s32
      %s36 = sphi 0, %s35
      %s52 = sphi 0, %s36
      %s58 = sphi 0, %s60
      %s61 = sphi 0, %s58
      %s62 = sphi 0, %s61
      %s78 = sphi 0, %s62
    $region4: #{tpu_custom_call.1} parent=1 // loop_header_branch
      %25 = sbr.rel (%p23) target = $region8
    $region5: #{tpu_custom_call.1} parent=1 // loop_body
      %s27 = ssub.s32 %s22, 1
      %s28 = ssub.s32 %s22, 2
      %s29 = sadd.s32 %s22, 1
      %s30 = ssub.s32 %s22, %s29
      %p31 = scmp.eq.s32.totalorder %s30, 0
      %s33 = sadd.s32 %s32, 1
      %s34 = scalar_select %p31, %s32, %s33
      %p37 = pneg %p31
      %p38 = scmp.eq.s32.totalorder %s22, 1
      %p39 = por %p37, %p38
      %p40 = scmp.ne.s32.totalorder %s32, %s35
      %p41 = scmp.eq.s32.totalorder %s22, 0
      %p42 = por %p40, %p41
      %p43 = scmp.ne.s32.totalorder %s32, %s35
      %p44 = scmp.eq.s32.totalorder %s27, 1
      %p45 = por %p43, %p44
      %p46 = scmp.ne.s32.totalorder %s35, %s36
      %p47 = scmp.eq.s32.totalorder %s27, 0
      %p48 = por %p46, %p47
      %p49 = scmp.ne.s32.totalorder %s35, %s36
      %p50 = scmp.eq.s32.totalorder %s28, 1
      %p51 = por %p49, %p50
      %p53 = scmp.ne.s32.totalorder %s36, %s52
      %p54 = scmp.eq.s32.totalorder %s28, 0
      %p55 = por %p53, %p54
      %s56 = ssub.s32 %s22, %s29
      %p57 = scmp.eq.s32.totalorder %s56, 0
      %s59 = sadd.s32 %s58, 1
      %s60 = scalar_select %p57, %s58, %s59
      %p63 = pneg %p57
      %p64 = scmp.eq.s32.totalorder %s22, 1
      %p65 = por %p63, %p64
      %p66 = scmp.ne.s32.totalorder %s58, %s61
      %p67 = scmp.eq.s32.totalorder %s22, 0
      %p68 = por %p66, %p67
      %p69 = scmp.ne.s32.totalorder %s58, %s61
      %p70 = scmp.eq.s32.totalorder %s27, 1
      %p71 = por %p69, %p70
      %p72 = scmp.ne.s32.totalorder %s61, %s62
      %p73 = scmp.eq.s32.totalorder %s27, 0
      %p74 = por %p72, %p73
      %p75 = scmp.ne.s32.totalorder %s61, %s62
      %p76 = scmp.eq.s32.totalorder %s28, 1
      %p77 = por %p75, %p76
      %p79 = scmp.ne.s32.totalorder %s62, %s78
      %p80 = scmp.eq.s32.totalorder %s28, 0
      %p81 = por %p79, %p80
      %p82 = scmp.le.s32.totalorder 1, %s22
      %p83 = scmp.lt.s32.totalorder %s22, 3
      %p84 = pnand %p82, %p83
      %p85 = pneg %p84
      // Predicated region
      $region9: #{tpu_custom_call.1} parent=5 // pred_check
        _
      $region10: #{tpu_custom_call.1} parent=5 // pred_check_branch
        %87 = sbr.rel (%p84) target = $region12
      $region11: #{tpu_custom_call.1} parent=5 // pred_region
        %s88 = ssub.s32 %s22, 1
      $region12: #{tpu_custom_call.1} parent=5 // pred_fallthru
        _
      %p89 = scmp.lt.s32.totalorder %s22, 2
      // Predicated region
      $region13: #{tpu_custom_call.1} parent=5 // pred_check
        %p90 = pneg %p89
      $region14: #{tpu_custom_call.1} parent=5 // pred_check_branch
        %92 = sbr.rel (%p90) target = $region16
      $region15: #{tpu_custom_call.1} parent=5 // pred_region
        // Predicated region
        $region17: #{tpu_custom_call.1} parent=15 // pred_check
          %p93 = pneg %p42
        $region18: #{tpu_custom_call.1} parent=15 // pred_check_branch
          %95 = sbr.rel (%p93) target = $region20
        $region19: #{tpu_custom_call.1} parent=15 // pred_region
          %s96 = sand.u32 %s32, 1
          %s97 = scalar_lea.sflag [#allocation5], %s96
          %s98 = sand.u32 %s32, 1
          %s99 = smul.addr %s98, 8
          %s100 = scalar_lea.vmem [#allocation4], %s99
          %102 = vsyncadd %s97, 0
          %s103 = smul.addr %s22, 8
          %s104 = scalar_lea.hbm %s1, %s103
          %s106 = sshll.u32 %s104, 4
          %s107 = int_to_ptr.hbm [resolvable:$true] %s106
          %s108 = sshll.u32 %s100, 4
          %s109 = int_to_ptr.vmem [resolvable:$true] %s108
          %111 = dma.hbm_to_vmem [thread:$0]  %s107, 128, %s109, %s97
        $region20: #{tpu_custom_call.1} parent=15 // pred_fallthru
          _
      $region16: #{tpu_custom_call.1} parent=5 // pred_fallthru
        _
      %p112 = scmp.le.s32.totalorder 1, %s22
      %p113 = scmp.lt.s32.totalorder %s22, 3
      %p114 = pnand %p112, %p113
      %p115 = pneg %p114
      // Predicated region
      $region21: #{tpu_custom_call.1} parent=5 // pred_check
        _
      $region22: #{tpu_custom_call.1} parent=5 // pred_check_branch
        %117 = sbr.rel (%p114) target = $region24
      $region23: #{tpu_custom_call.1} parent=5 // pred_region
        %s118 = ssub.s32 %s22, 1
        %s119 = sand.u32 %s35, 1
        %s120 = scalar_lea.sflag [#allocation5], %s119
        %s121 = sand.u32 %s35, 1
        %s122 = smul.addr %s121, 8
        %s123 = scalar_lea.vmem [#allocation4], %s122
        // Predicated region
        $region25: #{tpu_custom_call.1} parent=23 // pred_check
          %p124 = pneg %p48
        $region26: #{tpu_custom_call.1} parent=23 // pred_check_branch
          %126 = sbr.rel (%p124) target = $region28
        $region27: #{tpu_custom_call.1} parent=23 // pred_region
          %128 = dma.done %s120, 128
        $region28: #{tpu_custom_call.1} parent=23 // pred_fallthru
          _
        %s129 = sand.u32 %s35, 1
        %s130 = scalar_lea.sflag [#allocation5], %s129
        %s131 = sand.u32 %s35, 1
        %s132 = smul.addr %s131, 8
        %s133 = scalar_lea.vmem [#allocation4], %s132
        %p134 = pneg %p48
        %p135 = pneg %p45
        %p136 = pneg %p74
        %p137 = pneg %p71
        %s138 = sand.u32 %s61, 1
        %s139 = scalar_lea.sflag [#allocation6], %s138
        %s140 = sand.u32 %s61, 1
        %s141 = smul.addr %s140, 8
        %s142 = scalar_lea.vmem [#allocation7], %s141
        %s143 = sld [smem:[#allocation3]]
        %s144 = sld [smem:[#allocation3 + $0x1]]
        %s145 = sld [smem:[#allocation3 + $0x2]]
        %v146 = vld [vmem:[%s123] sm:$0xff]
        %v147 = vstv %s145
        %v148 = vsub.f32 %v146, %v147
        %v149 = vxor.u32 %v148, 2147483648
        %v150 = vmul.f32 %v149, 1.442695
        %v151 = vpow.pop %v150
        %v152 = vadd.f32 %v151, 1.0
        %v153 = vrcp.pop %v152
        %v154 = vmul.f32 %v152, %v153
        %v155 = vsub.f32 1.0, %v154
        %v156 = vmul.f32 %v153, %v155
        %v157 = vadd.f32 %v153, %v156
        %vm158 = vweird.f32 %v152
        %vm159 = vweird.f32 %v153
        %vm160 = vmor %vm158, %vm159
        %v161 = vsel %vm160, %v153, %v157
        %v162 = vand.u32 2147483647, %v152
        %vm163 = vcmp.eq.f32.partialorder %v162, 8.507059e+37
        %v164 = vand.u32 %v152, 2147483648
        %v165 = vor.u32 1.1754944e-38, %v164
        %v166 = vsel %vm163, %v165, %v161
        %v167 = vmul.f32 1.0, %v166
        %s168 = ssub.f32 %s144, %s143
        %v169 = vstv %s168
        %v170 = vmul.f32 %v167, %v169
        %v171 = vstv %s143
        %v172 = vadd.f32 %v170, %v171
        %173 = vst [vmem:[%s142] sm:$0xff] %v172
        %s174 = sand.u32 %s61, 1
        %s175 = scalar_lea.sflag [#allocation6], %s174
        %s176 = sand.u32 %s61, 1
        %s177 = smul.addr %s176, 8
        %s178 = scalar_lea.vmem [#allocation7], %s177
        // Predicated region
        $region29: #{tpu_custom_call.1} parent=23 // pred_check
          %p179 = pneg %p71
        $region30: #{tpu_custom_call.1} parent=23 // pred_check_branch
          %181 = sbr.rel (%p179) target = $region32
        $region31: #{tpu_custom_call.1} parent=23 // pred_region
          %183 = vsyncadd %s175, 0
          %s184 = smul.addr %s27, 8
          %s185 = scalar_lea.hbm %s2, %s184
          %s187 = sshll.u32 %s178, 4
          %s188 = int_to_ptr.vmem [resolvable:$true] %s187
          %s189 = sshll.u32 %s185, 4
          %s190 = int_to_ptr.hbm [resolvable:$true] %s189
          %192 = dma.vmem_to_hbm [thread:$0]  %s188, 128, %s190, %s175
        $region32: #{tpu_custom_call.1} parent=23 // pred_fallthru
          _
      $region24: #{tpu_custom_call.1} parent=5 // pred_fallthru
        _
      %p193 = scmp.le.s32.totalorder 2, %s22
      // Predicated region
      $region33: #{tpu_custom_call.1} parent=5 // pred_check
        %p194 = pneg %p193
      $region34: #{tpu_custom_call.1} parent=5 // pred_check_branch
        %196 = sbr.rel (%p194) target = $region36
      $region35: #{tpu_custom_call.1} parent=5 // pred_region
        %s197 = ssub.s32 %s22, 2
        // Predicated region
        $region37: #{tpu_custom_call.1} parent=35 // pred_check
          %p198 = pneg %p77
        $region38: #{tpu_custom_call.1} parent=35 // pred_check_branch
          %200 = sbr.rel (%p198) target = $region40
        $region39: #{tpu_custom_call.1} parent=35 // pred_region
          %s201 = sand.u32 %s62, 1
          %s202 = scalar_lea.sflag [#allocation6], %s201
          %s203 = sand.u32 %s62, 1
          %s204 = smul.addr %s203, 8
          %s205 = scalar_lea.vmem [#allocation7], %s204
          %207 = dma.done %s202, 128
        $region40: #{tpu_custom_call.1} parent=35 // pred_fallthru
          _
      $region36: #{tpu_custom_call.1} parent=5 // pred_fallthru
        _
    $region6: #{tpu_custom_call.1} parent=1 // loop_footer
      %s26 = sadd.s32 1, %s22
    $region7: #{tpu_custom_call.1} parent=1 // loop_footer_branch
      %21 = sbr.rel target = $region3
    $region8: #{tpu_custom_call.1} parent=1 // loop_exit
      _
    %208 = vsyncpa [#allocation5], 1
    %s209 = scalar_lea.sflag [#allocation5], 1
    %210 = vsyncpa %s209, 1
    %211 = vsyncpa [#allocation6], 1
    %s212 = scalar_lea.sflag [#allocation6], 1
    %213 = vsyncpa %s212, 1

</llo_original>
